<compile_context>
chip_gen: v5e
topology: v5e:2x2
jax: 0.10.0
libtpu: 0.0.40
codegen_flags: <defaults>
</compile_context>

<pallas_src>
import jax
import jax.numpy as jnp
from jax.experimental import pallas as pl
from jax.experimental.pallas import tpu as pltpu

LANE = 128  # hidden dim is padded to the 128-lane width


def _round_up(n, m):
    return ((n + m - 1) // m) * m


def qnetwork_kernel(x_ref, w1_ref, b1_ref, w2_ref, b2_ref, w3_ref, b3_ref,
                    out_ref):
    # x arrives as raw f32 (TM, S); cast to bf16 in VMEM (no extra HBM pass).
    x = x_ref[...].astype(jnp.bfloat16)

    # fc1 + relu   (bf16 MXU matmul, f32 accumulate; bias/ReLU on f32)
    h1 = jnp.dot(x, w1_ref[...], preferred_element_type=jnp.float32)
    h1 = jnp.maximum(h1 + b1_ref[...], 0.0)

    # fc2 + relu
    h2 = jnp.dot(h1.astype(jnp.bfloat16), w2_ref[...],
                 preferred_element_type=jnp.float32)
    h2 = jnp.maximum(h2 + b2_ref[...], 0.0)

    # fc3 (no activation) -> slim (TM, Ap) output block
    q = jnp.dot(h2.astype(jnp.bfloat16), w3_ref[...],
                preferred_element_type=jnp.float32)
    out_ref[...] = (q + b3_ref[...]).astype(out_ref.dtype)


def pack_params(params):
    """Pad hidden dim to 128 lanes, action dim to a multiple of 8.

    Weights -> bf16, biases -> f32.  w1 keeps its true input dim S (no feature
    padding of the state), so the wrapper can feed the raw f32 state directly.
    """
    w1, b1, w2, b2, w3, b3 = params
    S, H = w1.shape
    A = w3.shape[1]
    Hp = _round_up(H, LANE)   # hidden padded to lane width (NOT 256)
    Ap = _round_up(A, 8)      # action padded only to sublane multiple

    def pad_w(w, rows, cols):
        return jnp.pad(w, ((0, rows - w.shape[0]),
                           (0, cols - w.shape[1]))).astype(jnp.bfloat16)

    def pad_b(b, cols):
        return jnp.pad(b, ((0, 0), (0, cols - b.shape[1]))).astype(jnp.float32)

    packed = (pad_w(w1, S, Hp),  pad_b(b1, Hp),
              pad_w(w2, Hp, Hp), pad_b(b2, Hp),
              pad_w(w3, Hp, Ap), pad_b(b3, Ap))
    dims = (S, H, A, Hp, Ap)
    return packed, dims


def _choose_tm(B, block_m):
    """Batch tile: single small tile for tiny batches, otherwise >=2 tiles
    (keeps v7x megacore busy) of up to `block_m` rows (amortizes step overhead)."""
    if B <= 256:
        return _round_up(B, 16)            # one padded tile
    half = _round_up((B + 1) // 2, 128)    # guarantee >= 2 grid steps
    return max(256, min(_round_up(block_m, 256), half))


def _vmem_limit_bytes(TM, S, Hp, Ap):
    """Double-buffered x/out tiles + resident weights + f32/bf16 intermediates,
    with generous margin; capped at 48 MiB (safe on v7x's 64 MiB per-TC VMEM)."""
    est = (2 * TM * S * 4                              # x tiles (f32, dbl-buffered)
           + 2 * TM * Ap * 4                           # out tiles (f32, dbl-buffered)
           + 2 * (S * Hp + Hp * Hp + Hp * Ap) * 2      # bf16 weights
           + 2 * (2 * Hp + Ap) * 4                     # f32 biases
           + 6 * TM * Hp * 4)                          # h1/h2 + bf16 casts, generous
    return min(48 << 20, max(32 << 20, 2 * est))


def qnetwork_forward(state, packed_params, dims, *, block_m=2048):
    """state: (B, state_size) f32 -> (B, action_size) f32."""
    w1, b1, w2, b2, w3, b3 = packed_params
    S, H, A, Hp, Ap = dims
    B = state.shape[0]

    TM = _choose_tm(B, block_m)
    Bp = pl.cdiv(B, TM) * TM

    x = state.astype(jnp.float32)
    if Bp != B:
        # Batch-pad only (whole number of TM tiles); padded rows are sliced off
        # below and never returned.  No feature padding, no dtype pass.
        x = jnp.pad(x, ((0, Bp - B), (0, 0)))

    out = pl.pallas_call(
        qnetwork_kernel,
        out_shape=jax.ShapeDtypeStruct((Bp, Ap), jnp.float32),
        grid=(Bp // TM,),
        in_specs=[
            pl.BlockSpec((TM, S), lambda i: (i, 0)),    # x: tiled over batch, raw f32
            pl.BlockSpec((S, Hp), lambda i: (0, 0)),    # w1: resident across grid
            pl.BlockSpec((1, Hp), lambda i: (0, 0)),    # b1
            pl.BlockSpec((Hp, Hp), lambda i: (0, 0)),   # w2
            pl.BlockSpec((1, Hp), lambda i: (0, 0)),    # b2
            pl.BlockSpec((Hp, Ap), lambda i: (0, 0)),   # w3
            pl.BlockSpec((1, Ap), lambda i: (0, 0)),    # b3
        ],
        out_specs=pl.BlockSpec((TM, Ap), lambda i: (i, 0)),   # slim f32 writeback
        compiler_params=pltpu.CompilerParams(
            dimension_semantics=("parallel",),           # megacore sharding on v7x
            vmem_limit_bytes=_vmem_limit_bytes(TM, S, Hp, Ap),
        ),
    )(x, w1, b1, w2, b2, w3, b3)

    return out[:B, :A]


def init_qnetwork_params(key, state_size, action_size, hidden_size=64):
    """Deterministic init matching nn.Linear's default U(-1/sqrt(fan_in), +)."""
    ks = jax.random.split(key, 6)

    def linear(kw, kb, fan_in, fan_out):
        bound = 1.0 / jnp.sqrt(jnp.float32(fan_in))
        # stored as (in, out): transpose of PyTorch's (out, in)
        w = jax.random.uniform(kw, (fan_in, fan_out), jnp.float32,
                               minval=-bound, maxval=bound)
        b = jax.random.uniform(kb, (1, fan_out), jnp.float32,
                               minval=-bound, maxval=bound)
        return w, b

    w1, b1 = linear(ks[0], ks[1], state_size, hidden_size)
    w2, b2 = linear(ks[2], ks[3], hidden_size, hidden_size)
    w3, b3 = linear(ks[4], ks[5], hidden_size, action_size)
    return (w1, b1, w2, b2, w3, b3)


def qnetwork_reference_f32(state, params):
    """Pure-f32 JAX reference mirroring the PyTorch forward."""
    w1, b1, w2, b2, w3, b3 = params
    x = jnp.maximum(state @ w1 + b1, 0.0)
    x = jnp.maximum(x @ w2 + b2, 0.0)
    return x @ w3 + b3


def qnetwork_reference_bf16(state, params):
    """Reference with the kernel's exact precision (bf16 operands, f32 accumulate)."""
    w1, b1, w2, b2, w3, b3 = params
    bf = jnp.bfloat16
    h1 = jnp.dot(state.astype(bf), w1.astype(bf),
                 preferred_element_type=jnp.float32)
    h1 = jnp.maximum(h1 + b1, 0.0)
    h2 = jnp.dot(h1.astype(bf), w2.astype(bf),
                 preferred_element_type=jnp.float32)
    h2 = jnp.maximum(h2 + b2, 0.0)
    q = jnp.dot(h2.astype(bf), w3.astype(bf),
                preferred_element_type=jnp.float32)
    return q + b3


if __name__ == "__main__":
    state_size, action_size, hidden_size = 16, 4, 64

    key = jax.random.PRNGKey(0)
    k_params, k_small, k_large = jax.random.split(key, 3)

    params = init_qnetwork_params(k_params, state_size, action_size, hidden_size)
    packed, dims = pack_params(params)

    # Small batch (single padded tile) and a larger batch that exercises the
    # multi-tile "parallel" batch grid (B=512 -> two TM=256 tiles).
    for name, kk, batch in (("small", k_small, 8), ("large", k_large, 512)):
        state = jax.random.normal(kk, (batch, state_size), jnp.float32)

        q_pallas = jax.block_until_ready(qnetwork_forward(state, packed, dims))
        assert q_pallas.shape == (batch, action_size)

        q_bf16 = qnetwork_reference_bf16(state, params)   # same numerics as kernel
        q_f32 = qnetwork_reference_f32(state, params)     # PyTorch-semantics ref

        assert jnp.allclose(q_pallas, q_bf16, atol=1e-3, rtol=1e-3), \
            f"{name}: Pallas output does not match bf16-matched reference"
        assert jnp.allclose(q_pallas, q_f32, atol=5e-2, rtol=5e-2), \
            f"{name}: Pallas output does not match f32 reference"

    print("KERNEL_OK")
</pallas_src>

<mosaic_0001>
module attributes {stable_mosaic.version = 11 : i64} {
  func.func @qnetwork_kernel(%arg0: i32, %arg1: memref<16x16xf32, #tpu.memory_space<vmem>>, %arg2: memref<16x128xbf16, #tpu.memory_space<vmem>>, %arg3: memref<1x128xf32, #tpu.memory_space<vmem>>, %arg4: memref<128x128xbf16, #tpu.memory_space<vmem>>, %arg5: memref<1x128xf32, #tpu.memory_space<vmem>>, %arg6: memref<128x8xbf16, #tpu.memory_space<vmem>>, %arg7: memref<1x8xf32, #tpu.memory_space<vmem>>, %arg8: memref<16x8xf32, #tpu.memory_space<vmem>>) attributes {dimension_semantics = [#tpu.dimension_semantics<parallel>], iteration_bounds = array<i64: 1>, scalar_prefetch = 0 : i64, scratch_operands = 0 : i64, tpu.core_type = #tpu.core_type<tc>, window_params = [{transform_indices = @transform_0, window_bounds = array<i64: 16, 16>}, {pipeline_mode = #tpu.pipeline_mode<synchronous>, transform_indices = @transform_1, window_bounds = array<i64: 16, 128>}, {pipeline_mode = #tpu.pipeline_mode<synchronous>, transform_indices = @transform_2, window_bounds = array<i64: 1, 128>}, {pipeline_mode = #tpu.pipeline_mode<synchronous>, transform_indices = @transform_3, window_bounds = array<i64: 128, 128>}, {pipeline_mode = #tpu.pipeline_mode<synchronous>, transform_indices = @transform_4, window_bounds = array<i64: 1, 128>}, {pipeline_mode = #tpu.pipeline_mode<synchronous>, transform_indices = @transform_5, window_bounds = array<i64: 128, 8>}, {pipeline_mode = #tpu.pipeline_mode<synchronous>, transform_indices = @transform_6, window_bounds = array<i64: 1, 8>}, {transform_indices = @transform_7, window_bounds = array<i64: 16, 8>}]} {
    %c0 = arith.constant 0 : index
    %c0_0 = arith.constant 0 : index
    %0 = vector.load %arg1[%c0, %c0_0] : memref<16x16xf32, #tpu.memory_space<vmem>>, vector<16x16xf32>
    %1 = arith.truncf %0 : vector<16x16xf32> to vector<16x16xbf16>
    %c0_1 = arith.constant 0 : index
    %c0_2 = arith.constant 0 : index
    %2 = vector.load %arg2[%c0_1, %c0_2] : memref<16x128xbf16, #tpu.memory_space<vmem>>, vector<16x128xbf16>
    %cst = arith.constant dense<0.000000e+00> : vector<16x128xf32>
    %3 = tpu.matmul %1, %2, %cst {dimension_numbers = #tpu.dot_dimension_numbers<[1], [0], [0], [1], [0, 0, 1, 1], [], []>} : vector<16x16xbf16>, vector<16x128xbf16>, vector<16x128xf32> -> vector<16x128xf32>
    %c0_3 = arith.constant 0 : index
    %c0_4 = arith.constant 0 : index
    %4 = vector.load %arg3[%c0_3, %c0_4] : memref<1x128xf32, #tpu.memory_space<vmem>>, vector<1x128xf32>
    %5 = vector.broadcast %4 : vector<1x128xf32> to vector<16x128xf32>
    %6 = arith.addf %3, %5 : vector<16x128xf32>
    %cst_5 = arith.constant 0.000000e+00 : f32
    %7 = vector.broadcast %cst_5 : f32 to vector<16x128xf32>
    %8 = arith.maximumf %6, %7 : vector<16x128xf32>
    %9 = arith.truncf %8 : vector<16x128xf32> to vector<16x128xbf16>
    %c0_6 = arith.constant 0 : index
    %c0_7 = arith.constant 0 : index
    %10 = vector.load %arg4[%c0_6, %c0_7] : memref<128x128xbf16, #tpu.memory_space<vmem>>, vector<128x128xbf16>
    %cst_8 = arith.constant dense<0.000000e+00> : vector<16x128xf32>
    %11 = tpu.matmul %9, %10, %cst_8 {dimension_numbers = #tpu.dot_dimension_numbers<[1], [0], [0], [1], [0, 0, 1, 1], [], []>} : vector<16x128xbf16>, vector<128x128xbf16>, vector<16x128xf32> -> vector<16x128xf32>
    %c0_9 = arith.constant 0 : index
    %c0_10 = arith.constant 0 : index
    %12 = vector.load %arg5[%c0_9, %c0_10] : memref<1x128xf32, #tpu.memory_space<vmem>>, vector<1x128xf32>
    %13 = vector.broadcast %12 : vector<1x128xf32> to vector<16x128xf32>
    %14 = arith.addf %11, %13 : vector<16x128xf32>
    %cst_11 = arith.constant 0.000000e+00 : f32
    %15 = vector.broadcast %cst_11 : f32 to vector<16x128xf32>
    %16 = arith.maximumf %14, %15 : vector<16x128xf32>
    %17 = arith.truncf %16 : vector<16x128xf32> to vector<16x128xbf16>
    %c0_12 = arith.constant 0 : index
    %c0_13 = arith.constant 0 : index
    %18 = vector.load %arg6[%c0_12, %c0_13] : memref<128x8xbf16, #tpu.memory_space<vmem>>, vector<128x8xbf16>
    %cst_14 = arith.constant dense<0.000000e+00> : vector<16x8xf32>
    %19 = tpu.matmul %17, %18, %cst_14 {dimension_numbers = #tpu.dot_dimension_numbers<[1], [0], [0], [1], [0, 0, 1, 1], [], []>} : vector<16x128xbf16>, vector<128x8xbf16>, vector<16x8xf32> -> vector<16x8xf32>
    %c0_15 = arith.constant 0 : index
    %c0_16 = arith.constant 0 : index
    %20 = vector.load %arg7[%c0_15, %c0_16] : memref<1x8xf32, #tpu.memory_space<vmem>>, vector<1x8xf32>
    %21 = vector.broadcast %20 : vector<1x8xf32> to vector<16x8xf32>
    %22 = arith.addf %19, %21 : vector<16x8xf32>
    %c0_17 = arith.constant 0 : index
    %c0_18 = arith.constant 0 : index
    %23 = vector.load %arg8[%c0_17, %c0_18] : memref<16x8xf32, #tpu.memory_space<vmem>>, vector<16x8xf32>
    tpu.vector_store %arg8[%c0_17, %c0_18], %22 {strides = array<i32>} : memref<16x8xf32, #tpu.memory_space<vmem>>, vector<16x8xf32>,
    return
  }
  func.func @transform_0(%arg0: i32) -> (i32, i32) {
    %c0_i32 = arith.constant 0 : i32
    %c0_i32_0 = arith.constant 0 : i32
    return %arg0, %c0_i32 : i32, i32
  }
  func.func @transform_1(%arg0: i32) -> (i32, i32) {
    %c0_i32 = arith.constant 0 : i32
    %c0_i32_0 = arith.constant 0 : i32
    %c0_i32_1 = arith.constant 0 : i32
    return %c0_i32, %c0_i32_0 : i32, i32
  }
  func.func @transform_2(%arg0: i32) -> (i32, i32) {
    %c0_i32 = arith.constant 0 : i32
    %c0_i32_0 = arith.constant 0 : i32
    %c0_i32_1 = arith.constant 0 : i32
    return %c0_i32, %c0_i32_0 : i32, i32
  }
  func.func @transform_3(%arg0: i32) -> (i32, i32) {
    %c0_i32 = arith.constant 0 : i32
    %c0_i32_0 = arith.constant 0 : i32
    %c0_i32_1 = arith.constant 0 : i32
    return %c0_i32, %c0_i32_0 : i32, i32
  }
  func.func @transform_4(%arg0: i32) -> (i32, i32) {
    %c0_i32 = arith.constant 0 : i32
    %c0_i32_0 = arith.constant 0 : i32
    %c0_i32_1 = arith.constant 0 : i32
    return %c0_i32, %c0_i32_0 : i32, i32
  }
  func.func @transform_5(%arg0: i32) -> (i32, i32) {
    %c0_i32 = arith.constant 0 : i32
    %c0_i32_0 = arith.constant 0 : i32
    %c0_i32_1 = arith.constant 0 : i32
    return %c0_i32, %c0_i32_0 : i32, i32
  }
  func.func @transform_6(%arg0: i32) -> (i32, i32) {
    %c0_i32 = arith.constant 0 : i32
    %c0_i32_0 = arith.constant 0 : i32
    %c0_i32_1 = arith.constant 0 : i32
    return %c0_i32, %c0_i32_0 : i32, i32
  }
  func.func @transform_7(%arg0: i32) -> (i32, i32) {
    %c0_i32 = arith.constant 0 : i32
    %c0_i32_0 = arith.constant 0 : i32
    return %arg0, %c0_i32 : i32, i32
  }
}

</mosaic_0001>

<llo_original>
// kernel: tpu_custom_call.1
$region0: #{tpu_custom_call.1}
  #allocation0 [shape = 'u32[]', space=smem, size = 0x4, offset = 0x4, fixed_abs, tag = 'smem constant byte address 0x4 - core index']
  #allocation1 [shape = 'u32[72,128]{1,0:T(1,128)}', space=vmem, size = 0x9000, scoped, tag = 'internal scratch']
  %s0 = inlined_call_operand.hbm [shape: f32[16,16], index: 0, kind: input, shape index: {}]
  %s1 = inlined_call_operand.hbm [shape: bf16[16,128], index: 1, kind: input, shape index: {}]
  %s2 = inlined_call_operand.vmem [shape: f32[1,128], index: 2, kind: input, shape index: {}]
  %s3 = inlined_call_operand.vmem [shape: bf16[128,128], index: 3, kind: input, shape index: {}]
  %s4 = inlined_call_operand.vmem [shape: f32[1,128], index: 4, kind: input, shape index: {}]
  %s5 = inlined_call_operand.vmem [shape: bf16[128,8], index: 5, kind: input, shape index: {}]
  %s6 = inlined_call_operand.vmem [shape: f32[1,8], index: 6, kind: input, shape index: {}]
  %s7 = inlined_call_operand.vmem [shape: f32[16,8], index: 7, kind: output, shape index: {}]
  %s8 = sld [smem:[#allocation0]]
  $region46: #{tpu_custom_call.1} parent=0
    _
  %s10 = ssub.s32 1, %s8
  %s11 = scalar_select 0, %s10, %s8
  $region1: #{tpu_custom_call.1} parent=0
    #allocation2 [shape = 'u8[8192]{0}', space=vmem, size = 0x2000, scoped, tag = 'input window, operand 0, single buffered']
    #allocation3 [shape = 's32[1]{0}', space=sflag, size = 0x4, scoped, tag = 'scoped memory for tpu_custom_call.1']
    #allocation4 [shape = 'u8[4096]{0}', space=vmem, size = 0x1000, scoped, tag = 'input window, operand 1, single buffered']
    #allocation5 [shape = 's32[1]{0}', space=sflag, size = 0x4, scoped, tag = 'scoped memory for tpu_custom_call.1']
    %12 = vsyncpa [#allocation3], 0
    %13 = vsyncpa [#allocation5], 0
    // Predicated region
    $region2: #{tpu_custom_call.1} parent=1 // pred_check
      _
    $region3: #{tpu_custom_call.1} parent=1 // pred_check_branch
      %15 = sbr.rel (0) target = $region5
    $region4: #{tpu_custom_call.1} parent=1 // pred_region
      %17 = vsyncadd [#allocation3], 0
      %s18 = sshll.u32 %s0, 4
      %s19 = int_to_ptr.hbm [resolvable:$true] %s18
      %s20 = sshll.u32 [#allocation2], 4
      %s21 = int_to_ptr.vmem [resolvable:$true] %s20
      %26 = dma.hbm_to_vmem [thread:$0]  %s19, 256, %s21, [#allocation3], 128, 128, 8
    $region5: #{tpu_custom_call.1} parent=1 // pred_fallthru
      _
    // Predicated region
    $region6: #{tpu_custom_call.1} parent=1 // pred_check
      _
    $region7: #{tpu_custom_call.1} parent=1 // pred_check_branch
      %28 = sbr.rel (0) target = $region9
    $region8: #{tpu_custom_call.1} parent=1 // pred_region
      %30 = vsyncadd [#allocation5], 0
      %s31 = sshll.u32 %s1, 4
      %s32 = int_to_ptr.hbm [resolvable:$true] %s31
      %s33 = sshll.u32 [#allocation4], 4
      %s34 = int_to_ptr.vmem [resolvable:$true] %s33
      %39 = dma.hbm_to_vmem [thread:$0]  %s32, 128, %s34, [#allocation5], 64, 64, 4
    $region9: #{tpu_custom_call.1} parent=1 // pred_fallthru
      _
    // Predicated region
    $region10: #{tpu_custom_call.1} parent=1 // pred_check
      _
    $region11: #{tpu_custom_call.1} parent=1 // pred_check_branch
      %41 = sbr.rel (0) target = $region13
    $region12: #{tpu_custom_call.1} parent=1 // pred_region
      _
    $region13: #{tpu_custom_call.1} parent=1 // pred_fallthru
      _
    // Predicated region
    $region14: #{tpu_custom_call.1} parent=1 // pred_check
      _
    $region15: #{tpu_custom_call.1} parent=1 // pred_check_branch
      %43 = sbr.rel (0) target = $region17
    $region16: #{tpu_custom_call.1} parent=1 // pred_region
      _
    $region17: #{tpu_custom_call.1} parent=1 // pred_fallthru
      _
    // Predicated region
    $region18: #{tpu_custom_call.1} parent=1 // pred_check
      _
    $region19: #{tpu_custom_call.1} parent=1 // pred_check_branch
      %45 = sbr.rel (0) target = $region21
    $region20: #{tpu_custom_call.1} parent=1 // pred_region
      _
    $region21: #{tpu_custom_call.1} parent=1 // pred_fallthru
      _
    // Predicated region
    $region22: #{tpu_custom_call.1} parent=1 // pred_check
      _
    $region23: #{tpu_custom_call.1} parent=1 // pred_check_branch
      %47 = sbr.rel (0) target = $region25
    $region24: #{tpu_custom_call.1} parent=1 // pred_region
      _
    $region25: #{tpu_custom_call.1} parent=1 // pred_fallthru
      _
    // Predicated region
    $region26: #{tpu_custom_call.1} parent=1 // pred_check
      _
    $region27: #{tpu_custom_call.1} parent=1 // pred_check_branch
      %49 = sbr.rel (0) target = $region29
    $region28: #{tpu_custom_call.1} parent=1 // pred_region
      _
    $region29: #{tpu_custom_call.1} parent=1 // pred_fallthru
      _
    // Predicated region
    $region30: #{tpu_custom_call.1} parent=1 // pred_check
      _
    $region31: #{tpu_custom_call.1} parent=1 // pred_check_branch
      %51 = sbr.rel (0) target = $region33
    $region32: #{tpu_custom_call.1} parent=1 // pred_region
      %53 = dma.done [#allocation3], 256
    $region33: #{tpu_custom_call.1} parent=1 // pred_fallthru
      _
    // Predicated region
    $region34: #{tpu_custom_call.1} parent=1 // pred_check
      _
    $region35: #{tpu_custom_call.1} parent=1 // pred_check_branch
      %55 = sbr.rel (0) target = $region37
    $region36: #{tpu_custom_call.1} parent=1 // pred_region
      %57 = dma.done [#allocation5], 128
    $region37: #{tpu_custom_call.1} parent=1 // pred_fallthru
      _
    %v59 = vld [vmem:[#allocation2] sm:$0xff]
    %v60 = vld [vmem:[#allocation2 + $0x8] sm:$0xff]
    %v61 = vpack.c.bf16 %v60, %v59
    %v62 = vld [vmem:[#allocation4] sm:$0xf]
    %v63 = vld [vmem:[#allocation4 + $0x4] sm:$0xf]
    %v64 = vld [vmem:[%s2] sm:$0x1]
    %v66 = vperm.slane %v64, 0
    %v70 = vunpack.c.l.b16 %v62
    %v71 = vunpack.c.l.b16 %v63
    %v72 = vpack.c.b16 %v71, %v70
    %vm74 = vcmask 130048
    %v76 = vsel %vm74, %v61, 0
    %78 = vmatpush.bf16.msra.mxu0 0
    %79 = vmatpush.bf16.msra.mxu0 0
    %80 = vmatpush.bf16.msra.mxu0 0
    %81 = vmatpush.bf16.msra.mxu0 0
    %82 = vmatpush.bf16.msra.mxu0 0
    %83 = vmatpush.bf16.msra.mxu0 0
    %84 = vmatpush.bf16.msra.mxu0 0
    %85 = vmatpush.bf16.msra.mxu0 %v72
    %86 = vmatmul.bf16.gmra.mxu0 %v76
    %v87 = vpop.f32.mrf.mxu0
    %v88 = vadd.f32 %v66, %v87
    %v89 = vpop.f32.mrf.mxu0
    %v90 = vadd.f32 %v66, %v89
    %91 = vdwg.mxu0
    %v92 = vmax.f32 %v88, 0.0
    %v93 = vmax.f32 %v90, 0.0
    %v94 = vpack.c.bf16 %v93, %v92
    %v95 = vld [vmem:[%s3] sm:$0xf]
    %v96 = vld [vmem:[%s3 + $0x4] sm:$0xf]
    %v97 = vld [vmem:[%s3 + $0x8] sm:$0xf]
    %v98 = vld [vmem:[%s3 + $0xc] sm:$0xf]
    %v99 = vld [vmem:[%s3 + $0x10] sm:$0xf]
    %v100 = vld [vmem:[%s3 + $0x14] sm:$0xf]
    %v101 = vld [vmem:[%s3 + $0x18] sm:$0xf]
    %v102 = vld [vmem:[%s3 + $0x1c] sm:$0xf]
    %v103 = vld [vmem:[%s3 + $0x20] sm:$0xf]
    %v104 = vld [vmem:[%s3 + $0x24] sm:$0xf]
    %v105 = vld [vmem:[%s3 + $0x28] sm:$0xf]
    %v106 = vld [vmem:[%s3 + $0x2c] sm:$0xf]
    %v107 = vld [vmem:[%s3 + $0x30] sm:$0xf]
    %v108 = vld [vmem:[%s3 + $0x34] sm:$0xf]
    %v109 = vld [vmem:[%s3 + $0x38] sm:$0xf]
    %v110 = vld [vmem:[%s3 + $0x3c] sm:$0xf]
    %v111 = vld [vmem:[%s4] sm:$0x1]
    %v113 = vperm.slane %v111, 0
    %v131 = vunpack.c.l.b16 %v95
    %v132 = vunpack.c.l.b16 %v96
    %v133 = vunpack.c.l.b16 %v97
    %v134 = vunpack.c.l.b16 %v98
    %v135 = vunpack.c.l.b16 %v99
    %v136 = vunpack.c.l.b16 %v100
    %v137 = vunpack.c.l.b16 %v101
    %v138 = vunpack.c.l.b16 %v102
    %v139 = vunpack.c.l.b16 %v103
    %v140 = vunpack.c.l.b16 %v104
    %v141 = vunpack.c.l.b16 %v105
    %v142 = vunpack.c.l.b16 %v106
    %v143 = vunpack.c.l.b16 %v107
    %v144 = vunpack.c.l.b16 %v108
    %v145 = vunpack.c.l.b16 %v109
    %v146 = vunpack.c.l.b16 %v110
    %v147 = vpack.c.b16 %v132, %v131
    %v148 = vpack.c.b16 %v134, %v133
    %v149 = vpack.c.b16 %v136, %v135
    %v150 = vpack.c.b16 %v138, %v137
    %v151 = vpack.c.b16 %v140, %v139
    %v152 = vpack.c.b16 %v142, %v141
    %v153 = vpack.c.b16 %v144, %v143
    %v154 = vpack.c.b16 %v146, %v145
    %163 = vmatpush.bf16.msra.mxu0 %v154
    %164 = vmatpush.bf16.msra.mxu0 %v153
    %165 = vmatpush.bf16.msra.mxu0 %v152
    %166 = vmatpush.bf16.msra.mxu0 %v151
    %167 = vmatpush.bf16.msra.mxu0 %v150
    %168 = vmatpush.bf16.msra.mxu0 %v149
    %169 = vmatpush.bf16.msra.mxu0 %v148
    %170 = vmatpush.bf16.msra.mxu0 %v147
    %171 = vmatmul.bf16.gmra.mxu0 %v94
    %v172 = vpop.f32.mrf.mxu0
    %v173 = vadd.f32 %v113, %v172
    %v174 = vpop.f32.mrf.mxu0
    %v175 = vadd.f32 %v113, %v174
    %176 = vdwg.mxu0
    %v177 = vmax.f32 %v173, 0.0
    %v178 = vmax.f32 %v175, 0.0
    %v179 = vpack.c.bf16 %v178, %v177
    %v180 = vld [vmem:[%s5] sm:$0xf]
    %v181 = vld [vmem:[%s5 + $0x4] sm:$0xf]
    %v182 = vld [vmem:[%s5 + $0x8] sm:$0xf]
    %v183 = vld [vmem:[%s5 + $0xc] sm:$0xf]
    %v184 = vld [vmem:[%s5 + $0x10] sm:$0xf]
    %v185 = vld [vmem:[%s5 + $0x14] sm:$0xf]
    %v186 = vld [vmem:[%s5 + $0x18] sm:$0xf]
    %v187 = vld [vmem:[%s5 + $0x1c] sm:$0xf]
    %v188 = vld [vmem:[%s5 + $0x20] sm:$0xf]
    %v189 = vld [vmem:[%s5 + $0x24] sm:$0xf]
    %v190 = vld [vmem:[%s5 + $0x28] sm:$0xf]
    %v191 = vld [vmem:[%s5 + $0x2c] sm:$0xf]
    %v192 = vld [vmem:[%s5 + $0x30] sm:$0xf]
    %v193 = vld [vmem:[%s5 + $0x34] sm:$0xf]
    %v194 = vld [vmem:[%s5 + $0x38] sm:$0xf]
    %v195 = vld [vmem:[%s5 + $0x3c] sm:$0xf]
    %v196 = vld [vmem:[%s6] sm:$0x1]
    %v198 = vperm.slane %v196, 0
    %v216 = vunpack.c.l.b16 %v180
    %v217 = vunpack.c.l.b16 %v181
    %v218 = vunpack.c.l.b16 %v182
    %v219 = vunpack.c.l.b16 %v183
    %v220 = vunpack.c.l.b16 %v184
    %v221 = vunpack.c.l.b16 %v185
    %v222 = vunpack.c.l.b16 %v186
    %v223 = vunpack.c.l.b16 %v187
    %v224 = vunpack.c.l.b16 %v188
    %v225 = vunpack.c.l.b16 %v189
    %v226 = vunpack.c.l.b16 %v190
    %v227 = vunpack.c.l.b16 %v191
    %v228 = vunpack.c.l.b16 %v192
    %v229 = vunpack.c.l.b16 %v193
    %v230 = vunpack.c.l.b16 %v194
    %v231 = vunpack.c.l.b16 %v195
    %v232 = vpack.c.b16 %v217, %v216
    %v233 = vpack.c.b16 %v219, %v218
    %v234 = vpack.c.b16 %v221, %v220
    %v235 = vpack.c.b16 %v223, %v222
    %v236 = vpack.c.b16 %v225, %v224
    %v237 = vpack.c.b16 %v227, %v226
    %v238 = vpack.c.b16 %v229, %v228
    %v239 = vpack.c.b16 %v231, %v230
    %248 = vmatpush.bf16.msra.mxu0 %v239
    %249 = vmatpush.bf16.msra.mxu0 %v238
    %250 = vmatpush.bf16.msra.mxu0 %v237
    %251 = vmatpush.bf16.msra.mxu0 %v236
    %252 = vmatpush.bf16.msra.mxu0 %v235
    %253 = vmatpush.bf16.msra.mxu0 %v234
    %254 = vmatpush.bf16.msra.mxu0 %v233
    %255 = vmatpush.bf16.msra.mxu0 %v232
    %256 = vmatmul.bf16.gmra.mxu0 %v179
    %v257 = vpop.f32.mrf.mxu0
    %v258 = vadd.f32 %v198, %v257
    %v259 = vpop.f32.mrf.mxu0
    %v260 = vadd.f32 %v198, %v259
    %261 = vdwg.mxu0
    %vm262 = vcmask 64512
    %263 = vst.msk [vmem:[%s7] sm:$0xff] %vm262, %v258
    %264 = vst.msk [vmem:[%s7 + $0x8] sm:$0xff] %vm262, %v260
    // Predicated region
    $region38: #{tpu_custom_call.1} parent=1 // pred_check
      _
    $region39: #{tpu_custom_call.1} parent=1 // pred_check_branch
      %266 = sbr.rel (0) target = $region41
    $region40: #{tpu_custom_call.1} parent=1 // pred_region
      _
    $region41: #{tpu_custom_call.1} parent=1 // pred_fallthru
      _
    // Predicated region
    $region42: #{tpu_custom_call.1} parent=1 // pred_check
      _
    $region43: #{tpu_custom_call.1} parent=1 // pred_check_branch
      %268 = sbr.rel (0) target = $region45
    $region44: #{tpu_custom_call.1} parent=1 // pred_region
      _
    $region45: #{tpu_custom_call.1} parent=1 // pred_fallthru
      _
    %269 = vsyncpa [#allocation3], 1
    %270 = vsyncpa [#allocation5], 1

</llo_original>
